<compile_context>
chip_gen: v5e
topology: v5e:2x2
jax: 0.10.0
libtpu: 0.0.40
codegen_flags: <defaults>
</compile_context>

<pallas_src>
import jax
import jax.numpy as jnp
from jax.experimental import pallas as pl
from jax.experimental.pallas import tpu as pltpu


# ---------------------------------------------------------------------------
# Primary path: direct HBM -> HBM strided DMA copy (no VMEM staging).
# ---------------------------------------------------------------------------
def _make_dma_copy_kernel(NC, T_slow, alpha, n_chunks, chunk, nsem):
    """Kernel factory: out[:, t, :] = x[:, t*alpha, :] via raw DMAs.

    x_ref : (NC, T, HW)       in HBM (memory_space=pl.ANY)
    o_ref : (NC, T_slow, HW)  in HBM (memory_space=pl.ANY)
    sem   : (nsem,) DMA semaphores
    """

    def kernel(x_ref, o_ref, sem_ref):
        # All loop bounds are static Python ints -> straight-line DMA issue.
        # Start every DMA first (maximum overlap), then wait on all of them.
        descs = []
        j = 0
        for c in range(n_chunks):
            off = c * chunk
            sz = min(chunk, NC - off)
            for t in range(T_slow):
                d = pltpu.make_async_copy(
                    x_ref.at[pl.ds(off, sz), t * alpha],   # (sz, HW), row stride T*HW
                    o_ref.at[pl.ds(off, sz), t],           # (sz, HW), row stride T_slow*HW
                    sem_ref.at[j % nsem],
                )
                d.start()
                descs.append(d)
                j += 1
        for d in descs:
            d.wait()

    return kernel


def _slow_path_dma(x2, T_slow, alpha):
    """x2: (NC, T, HW). Returns x2[:, ::alpha, :] of shape (NC, T_slow, HW)."""
    NC, _T, HW = x2.shape
    itemsize = x2.dtype.itemsize

    # Keep a handful of DMAs in flight so HBM stays busy: one DMA per
    # (row-chunk, slow time step).
    target_in_flight = 8
    n_chunks = max(1, min(NC, -(-target_in_flight // T_slow)))
    chunk = -(-NC // n_chunks)
    n_chunks = -(-NC // chunk)
    n_dmas = n_chunks * T_slow
    nsem = min(n_dmas, 16)

    return pl.pallas_call(
        _make_dma_copy_kernel(NC, T_slow, alpha, n_chunks, chunk, nsem),
        out_shape=jax.ShapeDtypeStruct((NC, T_slow, HW), x2.dtype),
        in_specs=[pl.BlockSpec(memory_space=pl.ANY)],
        out_specs=pl.BlockSpec(memory_space=pl.ANY),
        scratch_shapes=[pltpu.SemaphoreType.DMA((nsem,))],
        cost_estimate=pl.CostEstimate(
            flops=0,
            transcendentals=0,
            bytes_accessed=2 * NC * T_slow * HW * itemsize,
        ),
    )(x2)


# ---------------------------------------------------------------------------
# Insurance path: pipelined copy through VMEM (BlockSpec auto-pipelining).
# ---------------------------------------------------------------------------
_VMEM_BUDGET_BYTES = 12 * 1024 * 1024   # fits every generation's default limit


def _copy_kernel(x_ref, o_ref):
    o_ref[...] = x_ref[...]


def _slow_path_blockspec(x, T_slow, alpha):
    N, C, T, H, W = x.shape
    NC, HW = N * C, H * W
    itemsize = x.dtype.itemsize
    row_bytes = HW * itemsize

    # Block rows: largest multiple of 8 (or the full extent) whose ~4x
    # double-buffered footprint fits the budget.  No divisor requirement:
    # the grid uses cdiv and Pallas masks the partial last block's writes.
    if 4 * NC * row_bytes <= _VMEM_BUDGET_BYTES:
        nc_blk = NC
    else:
        nc_blk = max(8, min(NC, (_VMEM_BUDGET_BYTES // (4 * row_bytes)) // 8 * 8))
    # Make sure the grid has >= 2 steps so v7x can shard across its 2 TCs.
    if T_slow * pl.cdiv(NC, nc_blk) < 2 and NC >= 16:
        nc_blk = max(8, (((NC + 1) // 2) + 7) // 8 * 8)

    vmem_needed = 4 * nc_blk * row_bytes
    vmem_limit = None
    if vmem_needed > _VMEM_BUDGET_BYTES:
        vmem_limit = int(vmem_needed + (2 << 20))   # explicit, graceful headroom

    params = pltpu.CompilerParams(
        dimension_semantics=("parallel", "parallel"),
        vmem_limit_bytes=vmem_limit,
    )
    cost = pl.CostEstimate(
        flops=0, transcendentals=0,
        bytes_accessed=2 * NC * T_slow * HW * itemsize)
    grid = (pl.cdiv(NC, nc_blk), T_slow)

    if HW % 128 == 0:
        # Lane-dense: view as (N*C, T*H*W); each block is (nc_blk, HW).
        x2 = x.reshape(NC, T * HW)
        out2 = pl.pallas_call(
            _copy_kernel,
            out_shape=jax.ShapeDtypeStruct((NC, T_slow * HW), x.dtype),
            grid=grid,
            in_specs=[pl.BlockSpec((nc_blk, HW), lambda i, t: (i, t * alpha))],
            out_specs=pl.BlockSpec((nc_blk, HW), lambda i, t: (i, t)),
            compiler_params=params,
            cost_estimate=cost,
        )(x2)
        return out2.reshape(N, C, T_slow, H, W)

    # Non-lane-aligned H*W: full-extent (H, W) last dims (always legal).
    x2 = x.reshape(NC, T, H, W)
    out2 = pl.pallas_call(
        _copy_kernel,
        out_shape=jax.ShapeDtypeStruct((NC, T_slow, H, W), x.dtype),
        grid=grid,
        in_specs=[pl.BlockSpec((nc_blk, 1, H, W),
                               lambda i, t: (i, t * alpha, 0, 0))],
        out_specs=pl.BlockSpec((nc_blk, 1, H, W),
                               lambda i, t: (i, t, 0, 0)),
        compiler_params=params,
        cost_estimate=cost,
    )(x2)
    return out2.reshape(N, C, T_slow, H, W)


# ---------------------------------------------------------------------------
# Public wrapper: SlowFastLoader.forward
# ---------------------------------------------------------------------------
def slowfast_loader(x, alpha: int):
    """Returns (x_s, x_f) with x_s = x[:, :, ::alpha] and x_f = x (view)."""
    assert x.ndim == 5
    assert isinstance(alpha, int) and alpha >= 1
    N, C, T, H, W = x.shape

    # Fast pathway: x[:] is a view in PyTorch; with immutable JAX arrays,
    # returning x is exactly equivalent and costs zero HBM traffic.
    x_f = x
    if alpha == 1:
        return x, x_f          # ::1 is also just a view of x

    T_slow = -(-T // alpha)    # == len(range(0, T, alpha))

    try:
        x2 = x.reshape(N * C, T, H * W)          # metadata-only for row-major
        out = _slow_path_dma(x2, T_slow, alpha)
        out = jax.block_until_ready(out)         # surface failures here
        x_s = out.reshape(N, C, T_slow, H, W)
    except Exception:
        # Insurance: pipelined copy-through-VMEM (always lowers on TPU).
        x_s = _slow_path_blockspec(x, T_slow, alpha)

    return x_s, x_f


if __name__ == "__main__":
    # Primary test: H*W = 256 (lane-aligned), alpha divides T.
    N, C, T, H, W = 2, 4, 8, 16, 16
    alpha = 2

    key = jax.random.PRNGKey(0)
    x = jax.random.normal(key, (N, C, T, H, W), dtype=jnp.float32)

    x_s, x_f = slowfast_loader(x, alpha)
    jax.block_until_ready((x_s, x_f))

    x_s_ref = x[:, :, ::alpha]
    x_f_ref = x
    assert x_f.shape == x_f_ref.shape and x_s.shape == x_s_ref.shape
    assert jnp.array_equal(x_f, x_f_ref)
    assert jnp.array_equal(x_s, x_s_ref)

    # Secondary test: small non-128-aligned H*W and T not divisible by alpha
    # (ceil semantics of ::alpha).  Same DMA path handles it.
    N2, C2, T2, H2, W2 = 2, 3, 7, 8, 8
    alpha2 = 3
    x_b = jax.random.normal(jax.random.PRNGKey(0), (N2, C2, T2, H2, W2),
                            dtype=jnp.float32)
    x_s_b, x_f_b = slowfast_loader(x_b, alpha2)
    jax.block_until_ready((x_s_b, x_f_b))
    assert jnp.array_equal(x_f_b, x_b)
    assert jnp.array_equal(x_s_b, x_b[:, :, ::alpha2])

    print("KERNEL_OK")
</pallas_src>

<mosaic_0001>
module attributes {stable_mosaic.version = 11 : i64} {
  func.func @kernel(%arg0: memref<8x8x256xf32, #tpu.memory_space<any>>, %arg1: memref<8x4x256xf32, #tpu.memory_space<any>>, %arg2: memref<8x!tpu.dma_semaphore, #tpu.memory_space<semaphore_mem>>) attributes {dimension_semantics = [], scalar_prefetch = 0 : i64, scratch_operands = 1 : i64, tpu.core_type = #tpu.core_type<tc>} {
    %c0_i32 = arith.constant 0 : i32
    %c0_i32_0 = arith.constant 0 : i32
    %c0_i32_1 = arith.constant 0 : i32
    %c0_i32_2 = arith.constant 0 : i32
    %c0_i32_3 = arith.constant 0 : i32
    %0 = tpu.memref_slice %arg0[%c0_i32_2, %c0_i32, %c0_i32_3] : memref<8x8x256xf32, #tpu.memory_space<any>> -> memref<4x1x256xf32, #tpu.memory_space<any>>
    %1 = tpu.memref_squeeze %0 : memref<4x1x256xf32, #tpu.memory_space<any>> -> memref<4x256xf32, #tpu.memory_space<any>>
    %c0_i32_4 = arith.constant 0 : i32
    %c0_i32_5 = arith.constant 0 : i32
    %2 = tpu.memref_slice %arg1[%c0_i32_4, %c0_i32_0, %c0_i32_5] : memref<8x4x256xf32, #tpu.memory_space<any>> -> memref<4x1x256xf32, #tpu.memory_space<any>>
    %3 = tpu.memref_squeeze %2 : memref<4x1x256xf32, #tpu.memory_space<any>> -> memref<4x256xf32, #tpu.memory_space<any>>
    %4 = tpu.memref_slice %arg2[%c0_i32_1] : memref<8x!tpu.dma_semaphore, #tpu.memory_space<semaphore_mem>> -> memref<1x!tpu.dma_semaphore, #tpu.memory_space<semaphore_mem>>
    %5 = tpu.memref_squeeze %4 : memref<1x!tpu.dma_semaphore, #tpu.memory_space<semaphore_mem>> -> memref<!tpu.dma_semaphore, #tpu.memory_space<semaphore_mem>>
    tpu.enqueue_dma source(%1 : memref<4x256xf32, #tpu.memory_space<any>>) target(%3 : memref<4x256xf32, #tpu.memory_space<any>>) target_semaphore(%5 : memref<!tpu.dma_semaphore, #tpu.memory_space<semaphore_mem>>)
    %c2_i32 = arith.constant 2 : i32
    %c1_i32 = arith.constant 1 : i32
    %c1_i32_6 = arith.constant 1 : i32
    %c0_i32_7 = arith.constant 0 : i32
    %c0_i32_8 = arith.constant 0 : i32
    %6 = tpu.memref_slice %arg0[%c0_i32_7, %c2_i32, %c0_i32_8] : memref<8x8x256xf32, #tpu.memory_space<any>> -> memref<4x1x256xf32, #tpu.memory_space<any>>
    %7 = tpu.memref_squeeze %6 : memref<4x1x256xf32, #tpu.memory_space<any>> -> memref<4x256xf32, #tpu.memory_space<any>>
    %c0_i32_9 = arith.constant 0 : i32
    %c0_i32_10 = arith.constant 0 : i32
    %8 = tpu.memref_slice %arg1[%c0_i32_9, %c1_i32, %c0_i32_10] : memref<8x4x256xf32, #tpu.memory_space<any>> -> memref<4x1x256xf32, #tpu.memory_space<any>>
    %9 = tpu.memref_squeeze %8 : memref<4x1x256xf32, #tpu.memory_space<any>> -> memref<4x256xf32, #tpu.memory_space<any>>
    %10 = tpu.memref_slice %arg2[%c1_i32_6] : memref<8x!tpu.dma_semaphore, #tpu.memory_space<semaphore_mem>> -> memref<1x!tpu.dma_semaphore, #tpu.memory_space<semaphore_mem>>
    %11 = tpu.memref_squeeze %10 : memref<1x!tpu.dma_semaphore, #tpu.memory_space<semaphore_mem>> -> memref<!tpu.dma_semaphore, #tpu.memory_space<semaphore_mem>>
    tpu.enqueue_dma source(%7 : memref<4x256xf32, #tpu.memory_space<any>>) target(%9 : memref<4x256xf32, #tpu.memory_space<any>>) target_semaphore(%11 : memref<!tpu.dma_semaphore, #tpu.memory_space<semaphore_mem>>)
    %c4_i32 = arith.constant 4 : i32
    %c2_i32_11 = arith.constant 2 : i32
    %c2_i32_12 = arith.constant 2 : i32
    %c0_i32_13 = arith.constant 0 : i32
    %c0_i32_14 = arith.constant 0 : i32
    %12 = tpu.memref_slice %arg0[%c0_i32_13, %c4_i32, %c0_i32_14] : memref<8x8x256xf32, #tpu.memory_space<any>> -> memref<4x1x256xf32, #tpu.memory_space<any>>
    %13 = tpu.memref_squeeze %12 : memref<4x1x256xf32, #tpu.memory_space<any>> -> memref<4x256xf32, #tpu.memory_space<any>>
    %c0_i32_15 = arith.constant 0 : i32
    %c0_i32_16 = arith.constant 0 : i32
    %14 = tpu.memref_slice %arg1[%c0_i32_15, %c2_i32_11, %c0_i32_16] : memref<8x4x256xf32, #tpu.memory_space<any>> -> memref<4x1x256xf32, #tpu.memory_space<any>>
    %15 = tpu.memref_squeeze %14 : memref<4x1x256xf32, #tpu.memory_space<any>> -> memref<4x256xf32, #tpu.memory_space<any>>
    %16 = tpu.memref_slice %arg2[%c2_i32_12] : memref<8x!tpu.dma_semaphore, #tpu.memory_space<semaphore_mem>> -> memref<1x!tpu.dma_semaphore, #tpu.memory_space<semaphore_mem>>
    %17 = tpu.memref_squeeze %16 : memref<1x!tpu.dma_semaphore, #tpu.memory_space<semaphore_mem>> -> memref<!tpu.dma_semaphore, #tpu.memory_space<semaphore_mem>>
    tpu.enqueue_dma source(%13 : memref<4x256xf32, #tpu.memory_space<any>>) target(%15 : memref<4x256xf32, #tpu.memory_space<any>>) target_semaphore(%17 : memref<!tpu.dma_semaphore, #tpu.memory_space<semaphore_mem>>)
    %c6_i32 = arith.constant 6 : i32
    %c3_i32 = arith.constant 3 : i32
    %c3_i32_17 = arith.constant 3 : i32
    %c0_i32_18 = arith.constant 0 : i32
    %c0_i32_19 = arith.constant 0 : i32
    %18 = tpu.memref_slice %arg0[%c0_i32_18, %c6_i32, %c0_i32_19] : memref<8x8x256xf32, #tpu.memory_space<any>> -> memref<4x1x256xf32, #tpu.memory_space<any>>
    %19 = tpu.memref_squeeze %18 : memref<4x1x256xf32, #tpu.memory_space<any>> -> memref<4x256xf32, #tpu.memory_space<any>>
    %c0_i32_20 = arith.constant 0 : i32
    %c0_i32_21 = arith.constant 0 : i32
    %20 = tpu.memref_slice %arg1[%c0_i32_20, %c3_i32, %c0_i32_21] : memref<8x4x256xf32, #tpu.memory_space<any>> -> memref<4x1x256xf32, #tpu.memory_space<any>>
    %21 = tpu.memref_squeeze %20 : memref<4x1x256xf32, #tpu.memory_space<any>> -> memref<4x256xf32, #tpu.memory_space<any>>
    %22 = tpu.memref_slice %arg2[%c3_i32_17] : memref<8x!tpu.dma_semaphore, #tpu.memory_space<semaphore_mem>> -> memref<1x!tpu.dma_semaphore, #tpu.memory_space<semaphore_mem>>
    %23 = tpu.memref_squeeze %22 : memref<1x!tpu.dma_semaphore, #tpu.memory_space<semaphore_mem>> -> memref<!tpu.dma_semaphore, #tpu.memory_space<semaphore_mem>>
    tpu.enqueue_dma source(%19 : memref<4x256xf32, #tpu.memory_space<any>>) target(%21 : memref<4x256xf32, #tpu.memory_space<any>>) target_semaphore(%23 : memref<!tpu.dma_semaphore, #tpu.memory_space<semaphore_mem>>)
    %c0_i32_22 = arith.constant 0 : i32
    %c0_i32_23 = arith.constant 0 : i32
    %c4_i32_24 = arith.constant 4 : i32
    %c4_i32_25 = arith.constant 4 : i32
    %c0_i32_26 = arith.constant 0 : i32
    %24 = tpu.memref_slice %arg0[%c4_i32_25, %c0_i32_22, %c0_i32_26] : memref<8x8x256xf32, #tpu.memory_space<any>> -> memref<4x1x256xf32, #tpu.memory_space<any>>
    %25 = tpu.memref_squeeze %24 : memref<4x1x256xf32, #tpu.memory_space<any>> -> memref<4x256xf32, #tpu.memory_space<any>>
    %c4_i32_27 = arith.constant 4 : i32
    %c0_i32_28 = arith.constant 0 : i32
    %26 = tpu.memref_slice %arg1[%c4_i32_27, %c0_i32_23, %c0_i32_28] : memref<8x4x256xf32, #tpu.memory_space<any>> -> memref<4x1x256xf32, #tpu.memory_space<any>>
    %27 = tpu.memref_squeeze %26 : memref<4x1x256xf32, #tpu.memory_space<any>> -> memref<4x256xf32, #tpu.memory_space<any>>
    %28 = tpu.memref_slice %arg2[%c4_i32_24] : memref<8x!tpu.dma_semaphore, #tpu.memory_space<semaphore_mem>> -> memref<1x!tpu.dma_semaphore, #tpu.memory_space<semaphore_mem>>
    %29 = tpu.memref_squeeze %28 : memref<1x!tpu.dma_semaphore, #tpu.memory_space<semaphore_mem>> -> memref<!tpu.dma_semaphore, #tpu.memory_space<semaphore_mem>>
    tpu.enqueue_dma source(%25 : memref<4x256xf32, #tpu.memory_space<any>>) target(%27 : memref<4x256xf32, #tpu.memory_space<any>>) target_semaphore(%29 : memref<!tpu.dma_semaphore, #tpu.memory_space<semaphore_mem>>)
    %c2_i32_29 = arith.constant 2 : i32
    %c1_i32_30 = arith.constant 1 : i32
    %c5_i32 = arith.constant 5 : i32
    %c4_i32_31 = arith.constant 4 : i32
    %c0_i32_32 = arith.constant 0 : i32
    %30 = tpu.memref_slice %arg0[%c4_i32_31, %c2_i32_29, %c0_i32_32] : memref<8x8x256xf32, #tpu.memory_space<any>> -> memref<4x1x256xf32, #tpu.memory_space<any>>
    %31 = tpu.memref_squeeze %30 : memref<4x1x256xf32, #tpu.memory_space<any>> -> memref<4x256xf32, #tpu.memory_space<any>>
    %c4_i32_33 = arith.constant 4 : i32
    %c0_i32_34 = arith.constant 0 : i32
    %32 = tpu.memref_slice %arg1[%c4_i32_33, %c1_i32_30, %c0_i32_34] : memref<8x4x256xf32, #tpu.memory_space<any>> -> memref<4x1x256xf32, #tpu.memory_space<any>>
    %33 = tpu.memref_squeeze %32 : memref<4x1x256xf32, #tpu.memory_space<any>> -> memref<4x256xf32, #tpu.memory_space<any>>
    %34 = tpu.memref_slice %arg2[%c5_i32] : memref<8x!tpu.dma_semaphore, #tpu.memory_space<semaphore_mem>> -> memref<1x!tpu.dma_semaphore, #tpu.memory_space<semaphore_mem>>
    %35 = tpu.memref_squeeze %34 : memref<1x!tpu.dma_semaphore, #tpu.memory_space<semaphore_mem>> -> memref<!tpu.dma_semaphore, #tpu.memory_space<semaphore_mem>>
    tpu.enqueue_dma source(%31 : memref<4x256xf32, #tpu.memory_space<any>>) target(%33 : memref<4x256xf32, #tpu.memory_space<any>>) target_semaphore(%35 : memref<!tpu.dma_semaphore, #tpu.memory_space<semaphore_mem>>)
    %c4_i32_35 = arith.constant 4 : i32
    %c2_i32_36 = arith.constant 2 : i32
    %c6_i32_37 = arith.constant 6 : i32
    %c4_i32_38 = arith.constant 4 : i32
    %c0_i32_39 = arith.constant 0 : i32
    %36 = tpu.memref_slice %arg0[%c4_i32_38, %c4_i32_35, %c0_i32_39] : memref<8x8x256xf32, #tpu.memory_space<any>> -> memref<4x1x256xf32, #tpu.memory_space<any>>
    %37 = tpu.memref_squeeze %36 : memref<4x1x256xf32, #tpu.memory_space<any>> -> memref<4x256xf32, #tpu.memory_space<any>>
    %c4_i32_40 = arith.constant 4 : i32
    %c0_i32_41 = arith.constant 0 : i32
    %38 = tpu.memref_slice %arg1[%c4_i32_40, %c2_i32_36, %c0_i32_41] : memref<8x4x256xf32, #tpu.memory_space<any>> -> memref<4x1x256xf32, #tpu.memory_space<any>>
    %39 = tpu.memref_squeeze %38 : memref<4x1x256xf32, #tpu.memory_space<any>> -> memref<4x256xf32, #tpu.memory_space<any>>
    %40 = tpu.memref_slice %arg2[%c6_i32_37] : memref<8x!tpu.dma_semaphore, #tpu.memory_space<semaphore_mem>> -> memref<1x!tpu.dma_semaphore, #tpu.memory_space<semaphore_mem>>
    %41 = tpu.memref_squeeze %40 : memref<1x!tpu.dma_semaphore, #tpu.memory_space<semaphore_mem>> -> memref<!tpu.dma_semaphore, #tpu.memory_space<semaphore_mem>>
    tpu.enqueue_dma source(%37 : memref<4x256xf32, #tpu.memory_space<any>>) target(%39 : memref<4x256xf32, #tpu.memory_space<any>>) target_semaphore(%41 : memref<!tpu.dma_semaphore, #tpu.memory_space<semaphore_mem>>)
    %c6_i32_42 = arith.constant 6 : i32
    %c3_i32_43 = arith.constant 3 : i32
    %c7_i32 = arith.constant 7 : i32
    %c4_i32_44 = arith.constant 4 : i32
    %c0_i32_45 = arith.constant 0 : i32
    %42 = tpu.memref_slice %arg0[%c4_i32_44, %c6_i32_42, %c0_i32_45] : memref<8x8x256xf32, #tpu.memory_space<any>> -> memref<4x1x256xf32, #tpu.memory_space<any>>
    %43 = tpu.memref_squeeze %42 : memref<4x1x256xf32, #tpu.memory_space<any>> -> memref<4x256xf32, #tpu.memory_space<any>>
    %c4_i32_46 = arith.constant 4 : i32
    %c0_i32_47 = arith.constant 0 : i32
    %44 = tpu.memref_slice %arg1[%c4_i32_46, %c3_i32_43, %c0_i32_47] : memref<8x4x256xf32, #tpu.memory_space<any>> -> memref<4x1x256xf32, #tpu.memory_space<any>>
    %45 = tpu.memref_squeeze %44 : memref<4x1x256xf32, #tpu.memory_space<any>> -> memref<4x256xf32, #tpu.memory_space<any>>
    %46 = tpu.memref_slice %arg2[%c7_i32] : memref<8x!tpu.dma_semaphore, #tpu.memory_space<semaphore_mem>> -> memref<1x!tpu.dma_semaphore, #tpu.memory_space<semaphore_mem>>
    %47 = tpu.memref_squeeze %46 : memref<1x!tpu.dma_semaphore, #tpu.memory_space<semaphore_mem>> -> memref<!tpu.dma_semaphore, #tpu.memory_space<semaphore_mem>>
    tpu.enqueue_dma source(%43 : memref<4x256xf32, #tpu.memory_space<any>>) target(%45 : memref<4x256xf32, #tpu.memory_space<any>>) target_semaphore(%47 : memref<!tpu.dma_semaphore, #tpu.memory_space<semaphore_mem>>)
    %c0_i32_48 = arith.constant 0 : i32
    %c0_i32_49 = arith.constant 0 : i32
    %c0_i32_50 = arith.constant 0 : i32
    %c0_i32_51 = arith.constant 0 : i32
    %c0_i32_52 = arith.constant 0 : i32
    %48 = tpu.memref_slice %arg0[%c0_i32_51, %c0_i32_48, %c0_i32_52] : memref<8x8x256xf32, #tpu.memory_space<any>> -> memref<4x1x256xf32, #tpu.memory_space<any>>
    %49 = tpu.memref_squeeze %48 : memref<4x1x256xf32, #tpu.memory_space<any>> -> memref<4x256xf32, #tpu.memory_space<any>>
    %c0_i32_53 = arith.constant 0 : i32
    %c0_i32_54 = arith.constant 0 : i32
    %50 = tpu.memref_slice %arg1[%c0_i32_53, %c0_i32_49, %c0_i32_54] : memref<8x4x256xf32, #tpu.memory_space<any>> -> memref<4x1x256xf32, #tpu.memory_space<any>>
    %51 = tpu.memref_squeeze %50 : memref<4x1x256xf32, #tpu.memory_space<any>> -> memref<4x256xf32, #tpu.memory_space<any>>
    %52 = tpu.memref_slice %arg2[%c0_i32_50] : memref<8x!tpu.dma_semaphore, #tpu.memory_space<semaphore_mem>> -> memref<1x!tpu.dma_semaphore, #tpu.memory_space<semaphore_mem>>
    %53 = tpu.memref_squeeze %52 : memref<1x!tpu.dma_semaphore, #tpu.memory_space<semaphore_mem>> -> memref<!tpu.dma_semaphore, #tpu.memory_space<semaphore_mem>>
    tpu.wait_dma2 semaphore(%53 : memref<!tpu.dma_semaphore, #tpu.memory_space<semaphore_mem>>) src(%49 : memref<4x256xf32, #tpu.memory_space<any>>) dst(%51 : memref<4x256xf32, #tpu.memory_space<any>>)
    %c2_i32_55 = arith.constant 2 : i32
    %c1_i32_56 = arith.constant 1 : i32
    %c1_i32_57 = arith.constant 1 : i32
    %c0_i32_58 = arith.constant 0 : i32
    %c0_i32_59 = arith.constant 0 : i32
    %54 = tpu.memref_slice %arg0[%c0_i32_58, %c2_i32_55, %c0_i32_59] : memref<8x8x256xf32, #tpu.memory_space<any>> -> memref<4x1x256xf32, #tpu.memory_space<any>>
    %55 = tpu.memref_squeeze %54 : memref<4x1x256xf32, #tpu.memory_space<any>> -> memref<4x256xf32, #tpu.memory_space<any>>
    %c0_i32_60 = arith.constant 0 : i32
    %c0_i32_61 = arith.constant 0 : i32
    %56 = tpu.memref_slice %arg1[%c0_i32_60, %c1_i32_56, %c0_i32_61] : memref<8x4x256xf32, #tpu.memory_space<any>> -> memref<4x1x256xf32, #tpu.memory_space<any>>
    %57 = tpu.memref_squeeze %56 : memref<4x1x256xf32, #tpu.memory_space<any>> -> memref<4x256xf32, #tpu.memory_space<any>>
    %58 = tpu.memref_slice %arg2[%c1_i32_57] : memref<8x!tpu.dma_semaphore, #tpu.memory_space<semaphore_mem>> -> memref<1x!tpu.dma_semaphore, #tpu.memory_space<semaphore_mem>>
    %59 = tpu.memref_squeeze %58 : memref<1x!tpu.dma_semaphore, #tpu.memory_space<semaphore_mem>> -> memref<!tpu.dma_semaphore, #tpu.memory_space<semaphore_mem>>
    tpu.wait_dma2 semaphore(%59 : memref<!tpu.dma_semaphore, #tpu.memory_space<semaphore_mem>>) src(%55 : memref<4x256xf32, #tpu.memory_space<any>>) dst(%57 : memref<4x256xf32, #tpu.memory_space<any>>)
    %c4_i32_62 = arith.constant 4 : i32
    %c2_i32_63 = arith.constant 2 : i32
    %c2_i32_64 = arith.constant 2 : i32
    %c0_i32_65 = arith.constant 0 : i32
    %c0_i32_66 = arith.constant 0 : i32
    %60 = tpu.memref_slice %arg0[%c0_i32_65, %c4_i32_62, %c0_i32_66] : memref<8x8x256xf32, #tpu.memory_space<any>> -> memref<4x1x256xf32, #tpu.memory_space<any>>
    %61 = tpu.memref_squeeze %60 : memref<4x1x256xf32, #tpu.memory_space<any>> -> memref<4x256xf32, #tpu.memory_space<any>>
    %c0_i32_67 = arith.constant 0 : i32
    %c0_i32_68 = arith.constant 0 : i32
    %62 = tpu.memref_slice %arg1[%c0_i32_67, %c2_i32_63, %c0_i32_68] : memref<8x4x256xf32, #tpu.memory_space<any>> -> memref<4x1x256xf32, #tpu.memory_space<any>>
    %63 = tpu.memref_squeeze %62 : memref<4x1x256xf32, #tpu.memory_space<any>> -> memref<4x256xf32, #tpu.memory_space<any>>
    %64 = tpu.memref_slice %arg2[%c2_i32_64] : memref<8x!tpu.dma_semaphore, #tpu.memory_space<semaphore_mem>> -> memref<1x!tpu.dma_semaphore, #tpu.memory_space<semaphore_mem>>
    %65 = tpu.memref_squeeze %64 : memref<1x!tpu.dma_semaphore, #tpu.memory_space<semaphore_mem>> -> memref<!tpu.dma_semaphore, #tpu.memory_space<semaphore_mem>>
    tpu.wait_dma2 semaphore(%65 : memref<!tpu.dma_semaphore, #tpu.memory_space<semaphore_mem>>) src(%61 : memref<4x256xf32, #tpu.memory_space<any>>) dst(%63 : memref<4x256xf32, #tpu.memory_space<any>>)
    %c6_i32_69 = arith.constant 6 : i32
    %c3_i32_70 = arith.constant 3 : i32
    %c3_i32_71 = arith.constant 3 : i32
    %c0_i32_72 = arith.constant 0 : i32
    %c0_i32_73 = arith.constant 0 : i32
    %66 = tpu.memref_slice %arg0[%c0_i32_72, %c6_i32_69, %c0_i32_73] : memref<8x8x256xf32, #tpu.memory_space<any>> -> memref<4x1x256xf32, #tpu.memory_space<any>>
    %67 = tpu.memref_squeeze %66 : memref<4x1x256xf32, #tpu.memory_space<any>> -> memref<4x256xf32, #tpu.memory_space<any>>
    %c0_i32_74 = arith.constant 0 : i32
    %c0_i32_75 = arith.constant 0 : i32
    %68 = tpu.memref_slice %arg1[%c0_i32_74, %c3_i32_70, %c0_i32_75] : memref<8x4x256xf32, #tpu.memory_space<any>> -> memref<4x1x256xf32, #tpu.memory_space<any>>
    %69 = tpu.memref_squeeze %68 : memref<4x1x256xf32, #tpu.memory_space<any>> -> memref<4x256xf32, #tpu.memory_space<any>>
    %70 = tpu.memref_slice %arg2[%c3_i32_71] : memref<8x!tpu.dma_semaphore, #tpu.memory_space<semaphore_mem>> -> memref<1x!tpu.dma_semaphore, #tpu.memory_space<semaphore_mem>>
    %71 = tpu.memref_squeeze %70 : memref<1x!tpu.dma_semaphore, #tpu.memory_space<semaphore_mem>> -> memref<!tpu.dma_semaphore, #tpu.memory_space<semaphore_mem>>
    tpu.wait_dma2 semaphore(%71 : memref<!tpu.dma_semaphore, #tpu.memory_space<semaphore_mem>>) src(%67 : memref<4x256xf32, #tpu.memory_space<any>>) dst(%69 : memref<4x256xf32, #tpu.memory_space<any>>)
    %c0_i32_76 = arith.constant 0 : i32
    %c0_i32_77 = arith.constant 0 : i32
    %c4_i32_78 = arith.constant 4 : i32
    %c4_i32_79 = arith.constant 4 : i32
    %c0_i32_80 = arith.constant 0 : i32
    %72 = tpu.memref_slice %arg0[%c4_i32_79, %c0_i32_76, %c0_i32_80] : memref<8x8x256xf32, #tpu.memory_space<any>> -> memref<4x1x256xf32, #tpu.memory_space<any>>
    %73 = tpu.memref_squeeze %72 : memref<4x1x256xf32, #tpu.memory_space<any>> -> memref<4x256xf32, #tpu.memory_space<any>>
    %c4_i32_81 = arith.constant 4 : i32
    %c0_i32_82 = arith.constant 0 : i32
    %74 = tpu.memref_slice %arg1[%c4_i32_81, %c0_i32_77, %c0_i32_82] : memref<8x4x256xf32, #tpu.memory_space<any>> -> memref<4x1x256xf32, #tpu.memory_space<any>>
    %75 = tpu.memref_squeeze %74 : memref<4x1x256xf32, #tpu.memory_space<any>> -> memref<4x256xf32, #tpu.memory_space<any>>
    %76 = tpu.memref_slice %arg2[%c4_i32_78] : memref<8x!tpu.dma_semaphore, #tpu.memory_space<semaphore_mem>> -> memref<1x!tpu.dma_semaphore, #tpu.memory_space<semaphore_mem>>
    %77 = tpu.memref_squeeze %76 : memref<1x!tpu.dma_semaphore, #tpu.memory_space<semaphore_mem>> -> memref<!tpu.dma_semaphore, #tpu.memory_space<semaphore_mem>>
    tpu.wait_dma2 semaphore(%77 : memref<!tpu.dma_semaphore, #tpu.memory_space<semaphore_mem>>) src(%73 : memref<4x256xf32, #tpu.memory_space<any>>) dst(%75 : memref<4x256xf32, #tpu.memory_space<any>>)
    %c2_i32_83 = arith.constant 2 : i32
    %c1_i32_84 = arith.constant 1 : i32
    %c5_i32_85 = arith.constant 5 : i32
    %c4_i32_86 = arith.constant 4 : i32
    %c0_i32_87 = arith.constant 0 : i32
    %78 = tpu.memref_slice %arg0[%c4_i32_86, %c2_i32_83, %c0_i32_87] : memref<8x8x256xf32, #tpu.memory_space<any>> -> memref<4x1x256xf32, #tpu.memory_space<any>>
    %79 = tpu.memref_squeeze %78 : memref<4x1x256xf32, #tpu.memory_space<any>> -> memref<4x256xf32, #tpu.memory_space<any>>
    %c4_i32_88 = arith.constant 4 : i32
    %c0_i32_89 = arith.constant 0 : i32
    %80 = tpu.memref_slice %arg1[%c4_i32_88, %c1_i32_84, %c0_i32_89] : memref<8x4x256xf32, #tpu.memory_space<any>> -> memref<4x1x256xf32, #tpu.memory_space<any>>
    %81 = tpu.memref_squeeze %80 : memref<4x1x256xf32, #tpu.memory_space<any>> -> memref<4x256xf32, #tpu.memory_space<any>>
    %82 = tpu.memref_slice %arg2[%c5_i32_85] : memref<8x!tpu.dma_semaphore, #tpu.memory_space<semaphore_mem>> -> memref<1x!tpu.dma_semaphore, #tpu.memory_space<semaphore_mem>>
    %83 = tpu.memref_squeeze %82 : memref<1x!tpu.dma_semaphore, #tpu.memory_space<semaphore_mem>> -> memref<!tpu.dma_semaphore, #tpu.memory_space<semaphore_mem>>
    tpu.wait_dma2 semaphore(%83 : memref<!tpu.dma_semaphore, #tpu.memory_space<semaphore_mem>>) src(%79 : memref<4x256xf32, #tpu.memory_space<any>>) dst(%81 : memref<4x256xf32, #tpu.memory_space<any>>)
    %c4_i32_90 = arith.constant 4 : i32
    %c2_i32_91 = arith.constant 2 : i32
    %c6_i32_92 = arith.constant 6 : i32
    %c4_i32_93 = arith.constant 4 : i32
    %c0_i32_94 = arith.constant 0 : i32
    %84 = tpu.memref_slice %arg0[%c4_i32_93, %c4_i32_90, %c0_i32_94] : memref<8x8x256xf32, #tpu.memory_space<any>> -> memref<4x1x256xf32, #tpu.memory_space<any>>
    %85 = tpu.memref_squeeze %84 : memref<4x1x256xf32, #tpu.memory_space<any>> -> memref<4x256xf32, #tpu.memory_space<any>>
    %c4_i32_95 = arith.constant 4 : i32
    %c0_i32_96 = arith.constant 0 : i32
    %86 = tpu.memref_slice %arg1[%c4_i32_95, %c2_i32_91, %c0_i32_96] : memref<8x4x256xf32, #tpu.memory_space<any>> -> memref<4x1x256xf32, #tpu.memory_space<any>>
    %87 = tpu.memref_squeeze %86 : memref<4x1x256xf32, #tpu.memory_space<any>> -> memref<4x256xf32, #tpu.memory_space<any>>
    %88 = tpu.memref_slice %arg2[%c6_i32_92] : memref<8x!tpu.dma_semaphore, #tpu.memory_space<semaphore_mem>> -> memref<1x!tpu.dma_semaphore, #tpu.memory_space<semaphore_mem>>
    %89 = tpu.memref_squeeze %88 : memref<1x!tpu.dma_semaphore, #tpu.memory_space<semaphore_mem>> -> memref<!tpu.dma_semaphore, #tpu.memory_space<semaphore_mem>>
    tpu.wait_dma2 semaphore(%89 : memref<!tpu.dma_semaphore, #tpu.memory_space<semaphore_mem>>) src(%85 : memref<4x256xf32, #tpu.memory_space<any>>) dst(%87 : memref<4x256xf32, #tpu.memory_space<any>>)
    %c6_i32_97 = arith.constant 6 : i32
    %c3_i32_98 = arith.constant 3 : i32
    %c7_i32_99 = arith.constant 7 : i32
    %c4_i32_100 = arith.constant 4 : i32
    %c0_i32_101 = arith.constant 0 : i32
    %90 = tpu.memref_slice %arg0[%c4_i32_100, %c6_i32_97, %c0_i32_101] : memref<8x8x256xf32, #tpu.memory_space<any>> -> memref<4x1x256xf32, #tpu.memory_space<any>>
    %91 = tpu.memref_squeeze %90 : memref<4x1x256xf32, #tpu.memory_space<any>> -> memref<4x256xf32, #tpu.memory_space<any>>
    %c4_i32_102 = arith.constant 4 : i32
    %c0_i32_103 = arith.constant 0 : i32
    %92 = tpu.memref_slice %arg1[%c4_i32_102, %c3_i32_98, %c0_i32_103] : memref<8x4x256xf32, #tpu.memory_space<any>> -> memref<4x1x256xf32, #tpu.memory_space<any>>
    %93 = tpu.memref_squeeze %92 : memref<4x1x256xf32, #tpu.memory_space<any>> -> memref<4x256xf32, #tpu.memory_space<any>>
    %94 = tpu.memref_slice %arg2[%c7_i32_99] : memref<8x!tpu.dma_semaphore, #tpu.memory_space<semaphore_mem>> -> memref<1x!tpu.dma_semaphore, #tpu.memory_space<semaphore_mem>>
    %95 = tpu.memref_squeeze %94 : memref<1x!tpu.dma_semaphore, #tpu.memory_space<semaphore_mem>> -> memref<!tpu.dma_semaphore, #tpu.memory_space<semaphore_mem>>
    tpu.wait_dma2 semaphore(%95 : memref<!tpu.dma_semaphore, #tpu.memory_space<semaphore_mem>>) src(%91 : memref<4x256xf32, #tpu.memory_space<any>>) dst(%93 : memref<4x256xf32, #tpu.memory_space<any>>)
    return
  }
}

module attributes {stable_mosaic.version = 11 : i64} {
  func.func @_copy_kernel(%arg0: i32, %arg1: i32, %arg2: memref<8x256xf32, #tpu.memory_space<vmem>>, %arg3: memref<8x256xf32, #tpu.memory_space<vmem>>) attributes {dimension_semantics = [#tpu.dimension_semantics<parallel>, #tpu.dimension_semantics<parallel>], iteration_bounds = array<i64: 1, 4>, scalar_prefetch = 0 : i64, scratch_operands = 0 : i64, tpu.core_type = #tpu.core_type<tc>, window_params = [{transform_indices = @transform_0, window_bounds = array<i64: 8, 256>}, {transform_indices = @transform_1, window_bounds = array<i64: 8, 256>}]} {
    %c0 = arith.constant 0 : index
    %c0_0 = arith.constant 0 : index
    %0 = vector.load %arg2[%c0, %c0_0] : memref<8x256xf32, #tpu.memory_space<vmem>>, vector<8x256xf32>
    %c0_1 = arith.constant 0 : index
    %c0_2 = arith.constant 0 : index
    %1 = vector.load %arg3[%c0_1, %c0_2] : memref<8x256xf32, #tpu.memory_space<vmem>>, vector<8x256xf32>
    tpu.vector_store %arg3[%c0_1, %c0_2], %0 {strides = array<i32>} : memref<8x256xf32, #tpu.memory_space<vmem>>, vector<8x256xf32>,
    return
  }
  func.func @transform_0(%arg0: i32, %arg1: i32) -> (i32, i32) {
    %c2_i32 = arith.constant 2 : i32
    %0 = arith.muli %arg1, %c2_i32 : i32
    %c0_i32 = arith.constant 0 : i32
    return %arg0, %0 : i32, i32
  }
  func.func @transform_1(%arg0: i32, %arg1: i32) -> (i32, i32) {
    %c0_i32 = arith.constant 0 : i32
    return %arg0, %arg1 : i32, i32
  }
}

</mosaic_0001>

<llo_original>
// kernel: tpu_custom_call.1
$region0: #{tpu_custom_call.1}
  #allocation0 [shape = 'u32[]', space=smem, size = 0x4, offset = 0x4, fixed_abs, tag = 'smem constant byte address 0x4 - core index']
  #allocation1 [shape = 'u32[72,128]{1,0:T(1,128)}', space=vmem, size = 0x9000, scoped, tag = 'internal scratch']
  #allocation2 [shape = 's32[8]{0}', space=sflag, size = 0x20, scoped, tag = 'scratch operand']
  #allocation3 [shape = 's32[]', space=sflag, size = 0x4, offset = 0, fixed_abs, tag = 'sflag constant byte address 0x0 - dummy sync flag']
  #allocation5 [shape = 's32[]', space=sflag, size = 0x4, offset = 0, fixed_abs, tag = 'sflag constant byte address 0x0 - dummy sync flag']
  #allocation7 [shape = 's32[]', space=sflag, size = 0x4, offset = 0, fixed_abs, tag = 'sflag constant byte address 0x0 - dummy sync flag']
  #allocation9 [shape = 's32[]', space=sflag, size = 0x4, offset = 0, fixed_abs, tag = 'sflag constant byte address 0x0 - dummy sync flag']
  #allocation11 [shape = 's32[]', space=sflag, size = 0x4, offset = 0, fixed_abs, tag = 'sflag constant byte address 0x0 - dummy sync flag']
  #allocation13 [shape = 's32[]', space=sflag, size = 0x4, offset = 0, fixed_abs, tag = 'sflag constant byte address 0x0 - dummy sync flag']
  #allocation15 [shape = 's32[]', space=sflag, size = 0x4, offset = 0, fixed_abs, tag = 'sflag constant byte address 0x0 - dummy sync flag']
  #allocation17 [shape = 's32[]', space=sflag, size = 0x4, offset = 0, fixed_abs, tag = 'sflag constant byte address 0x0 - dummy sync flag']
  %s0 = inlined_call_operand.hbm [shape: f32[8,8,256], index: 0, kind: input, shape index: {}]
  %s1 = inlined_call_operand.hbm [shape: f32[8,4,256], index: 1, kind: output, shape index: {}]
  %s2 = sld [smem:[#allocation0]]
  $region2: #{tpu_custom_call.1} parent=0
    _
  %s4 = ssub.s32 1, %s2
  %s5 = scalar_select 0, %s4, %s2
  $region1: #{tpu_custom_call.1} parent=0
    #allocation4 [shape = 'u32[3]{0}', space=smem, size = 0xc, scoped, tag = 'DMA stride descriptor']
    #allocation6 [shape = 'u32[3]{0}', space=smem, size = 0xc, scoped, tag = 'DMA stride descriptor']
    #allocation8 [shape = 'u32[3]{0}', space=smem, size = 0xc, scoped, tag = 'DMA stride descriptor']
    #allocation10 [shape = 'u32[3]{0}', space=smem, size = 0xc, scoped, tag = 'DMA stride descriptor']
    #allocation12 [shape = 'u32[3]{0}', space=smem, size = 0xc, scoped, tag = 'DMA stride descriptor']
    #allocation14 [shape = 'u32[3]{0}', space=smem, size = 0xc, scoped, tag = 'DMA stride descriptor']
    #allocation16 [shape = 'u32[3]{0}', space=smem, size = 0xc, scoped, tag = 'DMA stride descriptor']
    #allocation18 [shape = 'u32[3]{0}', space=smem, size = 0xc, scoped, tag = 'DMA stride descriptor']
    %s7 = sshll.u32 1, 14
    %s8 = sxor.u32 4294967295, %s7
    %s10 = sshll.u32 %s0, 4
    %s11 = int_to_ptr.hbm [resolvable:$true] %s10
    %s12 = sshll.u32 %s1, 4
    %s13 = int_to_ptr.hbm [resolvable:$true] %s12
    %17 = sst [smem:[#allocation4]] 128
    %s18 = scalar_lea.smem [#allocation4], 1
    %19 = sst [smem:[%s18]] 64
    %s20 = scalar_lea.smem [#allocation4], 2
    %21 = sst [smem:[%s20]] 1
    %23 = dma.general %s11, 128, %s13, [#allocation2], [#allocation3], [#allocation4], 0, 0
    %s24 = scalar_lea.hbm %s0, 2
    %s25 = scalar_lea.hbm %s1, 1
    %s26 = scalar_lea.sflag [#allocation2], 1
    %s28 = sshll.u32 1, 14
    %s29 = sxor.u32 4294967295, %s28
    %s31 = sshll.u32 %s24, 4
    %s32 = int_to_ptr.hbm [resolvable:$true] %s31
    %s33 = sshll.u32 %s25, 4
    %s34 = int_to_ptr.hbm [resolvable:$true] %s33
    %38 = sst [smem:[#allocation6]] 128
    %s39 = scalar_lea.smem [#allocation6], 1
    %40 = sst [smem:[%s39]] 64
    %s41 = scalar_lea.smem [#allocation6], 2
    %42 = sst [smem:[%s41]] 1
    %44 = dma.general %s32, 128, %s34, %s26, [#allocation5], [#allocation6], 0, 0
    %s45 = scalar_lea.hbm %s0, 4
    %s46 = scalar_lea.hbm %s1, 2
    %s47 = scalar_lea.sflag [#allocation2], 2
    %s49 = sshll.u32 1, 14
    %s50 = sxor.u32 4294967295, %s49
    %s52 = sshll.u32 %s45, 4
    %s53 = int_to_ptr.hbm [resolvable:$true] %s52
    %s54 = sshll.u32 %s46, 4
    %s55 = int_to_ptr.hbm [resolvable:$true] %s54
    %59 = sst [smem:[#allocation8]] 128
    %s60 = scalar_lea.smem [#allocation8], 1
    %61 = sst [smem:[%s60]] 64
    %s62 = scalar_lea.smem [#allocation8], 2
    %63 = sst [smem:[%s62]] 1
    %65 = dma.general %s53, 128, %s55, %s47, [#allocation7], [#allocation8], 0, 0
    %s66 = scalar_lea.hbm %s0, 6
    %s67 = scalar_lea.hbm %s1, 3
    %s68 = scalar_lea.sflag [#allocation2], 3
    %s70 = sshll.u32 1, 14
    %s71 = sxor.u32 4294967295, %s70
    %s73 = sshll.u32 %s66, 4
    %s74 = int_to_ptr.hbm [resolvable:$true] %s73
    %s75 = sshll.u32 %s67, 4
    %s76 = int_to_ptr.hbm [resolvable:$true] %s75
    %80 = sst [smem:[#allocation10]] 128
    %s81 = scalar_lea.smem [#allocation10], 1
    %82 = sst [smem:[%s81]] 64
    %s83 = scalar_lea.smem [#allocation10], 2
    %84 = sst [smem:[%s83]] 1
    %86 = dma.general %s74, 128, %s76, %s68, [#allocation9], [#allocation10], 0, 0
    %s87 = scalar_lea.hbm %s0, 64
    %s88 = scalar_lea.hbm %s1, 32
    %s89 = scalar_lea.sflag [#allocation2], 4
    %s91 = sshll.u32 1, 14
    %s92 = sxor.u32 4294967295, %s91
    %s94 = sshll.u32 %s87, 4
    %s95 = int_to_ptr.hbm [resolvable:$true] %s94
    %s96 = sshll.u32 %s88, 4
    %s97 = int_to_ptr.hbm [resolvable:$true] %s96
    %101 = sst [smem:[#allocation12]] 128
    %s102 = scalar_lea.smem [#allocation12], 1
    %103 = sst [smem:[%s102]] 64
    %s104 = scalar_lea.smem [#allocation12], 2
    %105 = sst [smem:[%s104]] 1
    %107 = dma.general %s95, 128, %s97, %s89, [#allocation11], [#allocation12], 0, 0
    %s108 = scalar_lea.hbm %s0, 66
    %s109 = scalar_lea.hbm %s1, 33
    %s110 = scalar_lea.sflag [#allocation2], 5
    %s112 = sshll.u32 1, 14
    %s113 = sxor.u32 4294967295, %s112
    %s115 = sshll.u32 %s108, 4
    %s116 = int_to_ptr.hbm [resolvable:$true] %s115
    %s117 = sshll.u32 %s109, 4
    %s118 = int_to_ptr.hbm [resolvable:$true] %s117
    %122 = sst [smem:[#allocation14]] 128
    %s123 = scalar_lea.smem [#allocation14], 1
    %124 = sst [smem:[%s123]] 64
    %s125 = scalar_lea.smem [#allocation14], 2
    %126 = sst [smem:[%s125]] 1
    %128 = dma.general %s116, 128, %s118, %s110, [#allocation13], [#allocation14], 0, 0
    %s129 = scalar_lea.hbm %s0, 68
    %s130 = scalar_lea.hbm %s1, 34
    %s131 = scalar_lea.sflag [#allocation2], 6
    %s133 = sshll.u32 1, 14
    %s134 = sxor.u32 4294967295, %s133
    %s136 = sshll.u32 %s129, 4
    %s137 = int_to_ptr.hbm [resolvable:$true] %s136
    %s138 = sshll.u32 %s130, 4
    %s139 = int_to_ptr.hbm [resolvable:$true] %s138
    %143 = sst [smem:[#allocation16]] 128
    %s144 = scalar_lea.smem [#allocation16], 1
    %145 = sst [smem:[%s144]] 64
    %s146 = scalar_lea.smem [#allocation16], 2
    %147 = sst [smem:[%s146]] 1
    %149 = dma.general %s137, 128, %s139, %s131, [#allocation15], [#allocation16], 0, 0
    %s150 = scalar_lea.hbm %s0, 70
    %s151 = scalar_lea.hbm %s1, 35
    %s152 = scalar_lea.sflag [#allocation2], 7
    %s154 = sshll.u32 1, 14
    %s155 = sxor.u32 4294967295, %s154
    %s157 = sshll.u32 %s150, 4
    %s158 = int_to_ptr.hbm [resolvable:$true] %s157
    %s159 = sshll.u32 %s151, 4
    %s160 = int_to_ptr.hbm [resolvable:$true] %s159
    %164 = sst [smem:[#allocation18]] 128
    %s165 = scalar_lea.smem [#allocation18], 1
    %166 = sst [smem:[%s165]] 64
    %s167 = scalar_lea.smem [#allocation18], 2
    %168 = sst [smem:[%s167]] 1
    %170 = dma.general %s158, 128, %s160, %s152, [#allocation17], [#allocation18], 0, 0
    %s171 = smul.u32 4, 2
    %s172 = sshll.u32 %s171, 4
    %173 = dma.done [#allocation2], %s172
    %s174 = sshll.u32 %s171, 4
    %175 = dma.done %s26, %s174
    %s176 = sshll.u32 %s171, 4
    %177 = dma.done %s47, %s176
    %s178 = sshll.u32 %s171, 4
    %179 = dma.done %s68, %s178
    %s180 = sshll.u32 %s171, 4
    %181 = dma.done %s89, %s180
    %s182 = sshll.u32 %s171, 4
    %183 = dma.done %s110, %s182
    %s184 = sshll.u32 %s171, 4
    %185 = dma.done %s131, %s184
    %s186 = sshll.u32 %s171, 4
    %187 = dma.done %s152, %s186
  %188 = vsyncmov [#allocation2]
  %s189 = vpop.sfrf %188
  %p190 = scmp.eq.s32.totalorder %s189, 0
  %p191 = pneg %p190
  %193 = shalt.err (%p191)
  %s194 = scalar_lea.sflag [#allocation2], 1
  %195 = vsyncmov %s194
  %s196 = vpop.sfrf %195
  %p197 = scmp.eq.s32.totalorder %s196, 0
  %p198 = pneg %p197
  %200 = shalt.err (%p198)
  %s201 = scalar_lea.sflag [#allocation2], 2
  %202 = vsyncmov %s201
  %s203 = vpop.sfrf %202
  %p204 = scmp.eq.s32.totalorder %s203, 0
  %p205 = pneg %p204
  %207 = shalt.err (%p205)
  %s208 = scalar_lea.sflag [#allocation2], 3
  %209 = vsyncmov %s208
  %s210 = vpop.sfrf %209
  %p211 = scmp.eq.s32.totalorder %s210, 0
  %p212 = pneg %p211
  %214 = shalt.err (%p212)
  %s215 = scalar_lea.sflag [#allocation2], 4
  %216 = vsyncmov %s215
  %s217 = vpop.sfrf %216
  %p218 = scmp.eq.s32.totalorder %s217, 0
  %p219 = pneg %p218
  %221 = shalt.err (%p219)
  %s222 = scalar_lea.sflag [#allocation2], 5
  %223 = vsyncmov %s222
  %s224 = vpop.sfrf %223
  %p225 = scmp.eq.s32.totalorder %s224, 0
  %p226 = pneg %p225
  %228 = shalt.err (%p226)
  %s229 = scalar_lea.sflag [#allocation2], 6
  %230 = vsyncmov %s229
  %s231 = vpop.sfrf %230
  %p232 = scmp.eq.s32.totalorder %s231, 0
  %p233 = pneg %p232
  %235 = shalt.err (%p233)
  %s236 = scalar_lea.sflag [#allocation2], 7
  %237 = vsyncmov %s236
  %s238 = vpop.sfrf %237
  %p239 = scmp.eq.s32.totalorder %s238, 0
  %p240 = pneg %p239
  %242 = shalt.err (%p240)

// kernel: tpu_custom_call.1
$region0: #{tpu_custom_call.1}
  #allocation0 [shape = 'u32[]', space=smem, size = 0x4, offset = 0x4, fixed_abs, tag = 'smem constant byte address 0x4 - core index']
  #allocation1 [shape = 'u32[72,128]{1,0:T(1,128)}', space=vmem, size = 0x9000, scoped, tag = 'internal scratch']
  %s0 = inlined_call_operand.hbm [shape: f32[8,2048], index: 0, kind: input, shape index: {}]
  %s1 = inlined_call_operand.hbm [shape: f32[8,1024], index: 1, kind: output, shape index: {}]
  %s2 = sld [smem:[#allocation0]]
  $region41: #{tpu_custom_call.1} parent=0
    _
  %s4 = ssub.s32 1, %s2
  %s5 = scalar_select 0, %s4, %s2
  $region1: #{tpu_custom_call.1} parent=0
    #allocation2 [shape = 'u8[16384]{0}', space=vmem, size = 0x4000, scoped, tag = 'input window, operand 0']
    #allocation3 [shape = 's32[2]{0}', space=sflag, size = 0x8, scoped, tag = 'scoped memory for tpu_custom_call.1']
    #allocation4 [shape = 's32[2]{0}', space=sflag, size = 0x8, scoped, tag = 'scoped memory for tpu_custom_call.1']
    #allocation5 [shape = 'u8[16384]{0}', space=vmem, size = 0x4000, scoped, tag = 'output window, operand 0']
    %6 = vsyncpa [#allocation3], 0
    %s7 = scalar_lea.sflag [#allocation3], 1
    %8 = vsyncpa %s7, 0
    %9 = vsyncpa [#allocation4], 0
    %s10 = scalar_lea.sflag [#allocation4], 1
    %11 = vsyncpa %s10, 0
    loop: start=0, step=1, limit=6
    $region2: #{tpu_custom_call.1} parent=1 // loop_pre_header
      _
    $region3: #{tpu_custom_call.1} parent=1 // loop_header
      %s13 = sphi 0, %s17
      %p14 = scmp.ge.s32.totalorder %s13, 6
      %s20 = sphi 0, %s32
      %s21 = sphi 0, %s28
      %s22 = sphi 0, %s20
      %s23 = sphi 0, %s21
      %s24 = sphi 0, %s22
      %s25 = sphi 0, %s23
      %s39 = sphi 0, %s41
      %s42 = sphi 0, %s39
      %s43 = sphi 0, %s42
      %s59 = sphi 0, %s43
      %s67 = sphi 0, %s69
      %s70 = sphi 0, %s67
      %s71 = sphi 0, %s70
      %s87 = sphi 0, %s71
    $region4: #{tpu_custom_call.1} parent=1 // loop_header_branch
      %16 = sbr.rel (%p14) target = $region8
    $region5: #{tpu_custom_call.1} parent=1 // loop_body
      %s18 = ssub.s32 %s13, 1
      %s19 = ssub.s32 %s13, 2
      %s26 = sadd.s32 1, %s21
      %p27 = scmp.ge.s32.totalorder %s26, 4
      %s28 = scalar_select %p27, 0, %s26
      %s29 = sadd.s32 1, %s20
      %s30 = scalar_select %p27, %s29, %s20
      %p31 = scmp.ge.s32.totalorder %s30, 1
      %s32 = scalar_select %p31, 0, %s30
      %s33 = smul.u32 %s21, 2
      %s34 = smul.u32 %s28, 2
      %s35 = ssub.s32 %s20, %s32
      %s36 = ssub.s32 %s33, %s34
      %s37 = sor.u32 %s35, %s36
      %p38 = scmp.eq.s32.totalorder %s37, 0
      %s40 = sadd.s32 %s39, 1
      %s41 = scalar_select %p38, %s39, %s40
      %p44 = pneg %p38
      %p45 = scmp.eq.s32.totalorder %s13, 3
      %p46 = por %p44, %p45
      %p47 = scmp.ne.s32.totalorder %s39, %s42
      %p48 = scmp.eq.s32.totalorder %s13, 0
      %p49 = por %p47, %p48
      %p50 = scmp.ne.s32.totalorder %s39, %s42
      %p51 = scmp.eq.s32.totalorder %s18, 3
      %p52 = por %p50, %p51
      %p53 = scmp.ne.s32.totalorder %s42, %s43
      %p54 = scmp.eq.s32.totalorder %s18, 0
      %p55 = por %p53, %p54
      %p56 = scmp.ne.s32.totalorder %s42, %s43
      %p57 = scmp.eq.s32.totalorder %s19, 3
      %p58 = por %p56, %p57
      %p60 = scmp.ne.s32.totalorder %s43, %s59
      %p61 = scmp.eq.s32.totalorder %s19, 0
      %p62 = por %p60, %p61
      %s63 = ssub.s32 %s20, %s32
      %s64 = ssub.s32 %s21, %s28
      %s65 = sor.u32 %s63, %s64
      %p66 = scmp.eq.s32.totalorder %s65, 0
      %s68 = sadd.s32 %s67, 1
      %s69 = scalar_select %p66, %s67, %s68
      %p72 = pneg %p66
      %p73 = scmp.eq.s32.totalorder %s13, 3
      %p74 = por %p72, %p73
      %p75 = scmp.ne.s32.totalorder %s67, %s70
      %p76 = scmp.eq.s32.totalorder %s13, 0
      %p77 = por %p75, %p76
      %p78 = scmp.ne.s32.totalorder %s67, %s70
      %p79 = scmp.eq.s32.totalorder %s18, 3
      %p80 = por %p78, %p79
      %p81 = scmp.ne.s32.totalorder %s70, %s71
      %p82 = scmp.eq.s32.totalorder %s18, 0
      %p83 = por %p81, %p82
      %p84 = scmp.ne.s32.totalorder %s70, %s71
      %p85 = scmp.eq.s32.totalorder %s19, 3
      %p86 = por %p84, %p85
      %p88 = scmp.ne.s32.totalorder %s71, %s87
      %p89 = scmp.eq.s32.totalorder %s19, 0
      %p90 = por %p88, %p89
      %p91 = scmp.le.s32.totalorder 1, %s13
      %p92 = scmp.lt.s32.totalorder %s13, 5
      %p93 = pnand %p91, %p92
      %p94 = pneg %p93
      // Predicated region
      $region9: #{tpu_custom_call.1} parent=5 // pred_check
        _
      $region10: #{tpu_custom_call.1} parent=5 // pred_check_branch
        %96 = sbr.rel (%p93) target = $region12
      $region11: #{tpu_custom_call.1} parent=5 // pred_region
        %s97 = ssub.s32 %s13, 1
      $region12: #{tpu_custom_call.1} parent=5 // pred_fallthru
        _
      %p98 = scmp.lt.s32.totalorder %s13, 4
      // Predicated region
      $region13: #{tpu_custom_call.1} parent=5 // pred_check
        %p99 = pneg %p98
      $region14: #{tpu_custom_call.1} parent=5 // pred_check_branch
        %101 = sbr.rel (%p99) target = $region16
      $region15: #{tpu_custom_call.1} parent=5 // pred_region
        // Predicated region
        $region17: #{tpu_custom_call.1} parent=15 // pred_check
          %p102 = pneg %p49
        $region18: #{tpu_custom_call.1} parent=15 // pred_check_branch
          %104 = sbr.rel (%p102) target = $region20
        $region19: #{tpu_custom_call.1} parent=15 // pred_region
          %s105 = sand.u32 %s39, 1
          %s106 = scalar_lea.sflag [#allocation3], %s105
          %s107 = sand.u32 %s39, 1
          %s108 = smul.addr %s107, 16
          %s109 = scalar_lea.vmem [#allocation2], %s108
          %s110 = smul.u32 %s21, 2
          %s111 = smul.u32 2, %s110
          %113 = vsyncadd %s106, 0
          %s114 = smul.addr %s20, 16
          %s115 = sadd.s32 %s111, %s114
          %s116 = smul.addr %s115, 8
          %s117 = scalar_lea.hbm %s0, %s116
          %s119 = sshll.u32 %s117, 4
          %s120 = int_to_ptr.hbm [resolvable:$true] %s119
          %s121 = sshll.u32 %s109, 4
          %s122 = int_to_ptr.vmem [resolvable:$true] %s121
          %124 = dma.hbm_to_vmem [thread:$0]  %s120, 256, %s122, %s106
        $region20: #{tpu_custom_call.1} parent=15 // pred_fallthru
          _
      $region16: #{tpu_custom_call.1} parent=5 // pred_fallthru
        _
      %p125 = scmp.le.s32.totalorder 1, %s13
      %p126 = scmp.lt.s32.totalorder %s13, 5
      %p127 = pnand %p125, %p126
      %p128 = pneg %p127
      // Predicated region
      $region21: #{tpu_custom_call.1} parent=5 // pred_check
        _
      $region22: #{tpu_custom_call.1} parent=5 // pred_check_branch
        %130 = sbr.rel (%p127) target = $region24
      $region23: #{tpu_custom_call.1} parent=5 // pred_region
        %s131 = ssub.s32 %s13, 1
        %s132 = sand.u32 %s42, 1
        %s133 = scalar_lea.sflag [#allocation3], %s132
        %s134 = sand.u32 %s42, 1
        %s135 = smul.addr %s134, 16
        %s136 = scalar_lea.vmem [#allocation2], %s135
        // Predicated region
        $region25: #{tpu_custom_call.1} parent=23 // pred_check
          %p137 = pneg %p55
        $region26: #{tpu_custom_call.1} parent=23 // pred_check_branch
          %139 = sbr.rel (%p137) target = $region28
        $region27: #{tpu_custom_call.1} parent=23 // pred_region
          %141 = dma.done %s133, 256
        $region28: #{tpu_custom_call.1} parent=23 // pred_fallthru
          _
        %s142 = sand.u32 %s42, 1
        %s143 = scalar_lea.sflag [#allocation3], %s142
        %s144 = sand.u32 %s42, 1
        %s145 = smul.addr %s144, 16
        %s146 = scalar_lea.vmem [#allocation2], %s145
        %p147 = pneg %p55
        %p148 = pneg %p52
        %p149 = pneg %p83
        %p150 = pneg %p80
        %s151 = sand.u32 %s70, 1
        %s152 = scalar_lea.sflag [#allocation4], %s151
        %s153 = sand.u32 %s70, 1
        %s154 = smul.addr %s153, 16
        %s155 = scalar_lea.vmem [#allocation5], %s154
        %s156 = smul.u32 %s23, 2
        %s157 = smul.u32 2, %s156
        %s158 = smul.u32 2, %s23
        %v159 = vld [vmem:[%s136] sm:$0xff]
        %v160 = vld [vmem:[%s136 + $0x8] sm:$0xff]
        %161 = vst [vmem:[%s155] sm:$0xff] %v159
        %162 = vst [vmem:[%s155 + $0x8] sm:$0xff] %v160
        %s163 = sand.u32 %s70, 1
        %s164 = scalar_lea.sflag [#allocation4], %s163
        %s165 = sand.u32 %s70, 1
        %s166 = smul.addr %s165, 16
        %s167 = scalar_lea.vmem [#allocation5], %s166
        // Predicated region
        $region29: #{tpu_custom_call.1} parent=23 // pred_check
          %p168 = pneg %p80
        $region30: #{tpu_custom_call.1} parent=23 // pred_check_branch
          %170 = sbr.rel (%p168) target = $region32
        $region31: #{tpu_custom_call.1} parent=23 // pred_region
          %s171 = smul.u32 2, %s23
          %173 = vsyncadd %s164, 0
          %s174 = smul.addr %s22, 8
          %s175 = sadd.s32 %s171, %s174
          %s176 = smul.addr %s175, 8
          %s177 = scalar_lea.hbm %s1, %s176
          %s179 = sshll.u32 %s167, 4
          %s180 = int_to_ptr.vmem [resolvable:$true] %s179
          %s181 = sshll.u32 %s177, 4
          %s182 = int_to_ptr.hbm [resolvable:$true] %s181
          %184 = dma.vmem_to_hbm [thread:$0]  %s180, 256, %s182, %s164
        $region32: #{tpu_custom_call.1} parent=23 // pred_fallthru
          _
      $region24: #{tpu_custom_call.1} parent=5 // pred_fallthru
        _
      %p185 = scmp.le.s32.totalorder 2, %s13
      // Predicated region
      $region33: #{tpu_custom_call.1} parent=5 // pred_check
        %p186 = pneg %p185
      $region34: #{tpu_custom_call.1} parent=5 // pred_check_branch
        %188 = sbr.rel (%p186) target = $region36
      $region35: #{tpu_custom_call.1} parent=5 // pred_region
        %s189 = ssub.s32 %s13, 2
        // Predicated region
        $region37: #{tpu_custom_call.1} parent=35 // pred_check
          %p190 = pneg %p86
        $region38: #{tpu_custom_call.1} parent=35 // pred_check_branch
          %192 = sbr.rel (%p190) target = $region40
        $region39: #{tpu_custom_call.1} parent=35 // pred_region
          %s193 = sand.u32 %s71, 1
          %s194 = scalar_lea.sflag [#allocation4], %s193
          %s195 = sand.u32 %s71, 1
          %s196 = smul.addr %s195, 16
          %s197 = scalar_lea.vmem [#allocation5], %s196
          %199 = dma.done %s194, 256
        $region40: #{tpu_custom_call.1} parent=35 // pred_fallthru
          _
      $region36: #{tpu_custom_call.1} parent=5 // pred_fallthru
        _
    $region6: #{tpu_custom_call.1} parent=1 // loop_footer
      %s17 = sadd.s32 1, %s13
    $region7: #{tpu_custom_call.1} parent=1 // loop_footer_branch
      %12 = sbr.rel target = $region3
    $region8: #{tpu_custom_call.1} parent=1 // loop_exit
      _
    %200 = vsyncpa [#allocation3], 1
    %s201 = scalar_lea.sflag [#allocation3], 1
    %202 = vsyncpa %s201, 1
    %203 = vsyncpa [#allocation4], 1
    %s204 = scalar_lea.sflag [#allocation4], 1
    %205 = vsyncpa %s204, 1

</llo_original>
